<compile_context>
chip_gen: v7x
topology: tpu7x:2x2x1
jax: 0.10.0
libtpu: 0.0.40
codegen_flags: <defaults>
</compile_context>

<pallas_src>
import jax
import jax.numpy as jnp
from jax.experimental import pallas as pl
from jax.experimental.pallas import tpu as pltpu


# -----------------------------------------------------------------------------
# Kernel: one step per batch tile.  All S sources are handled by four
# lane-packed matmuls (two for the source transforms, two for the confidence
# nets), then fused on the VPU.
# -----------------------------------------------------------------------------
def _lagrangian_kernel(x_ref, lam_ref,
                       w1_ref, b1_ref, w2_ref, b2_ref,
                       wc1_ref, bc1_ref, wc2_ref, bc2_ref,
                       out_ref, conf_ref, final_ref):
    D = final_ref.shape[-1]          # input_dim
    S = conf_ref.shape[-1]           # n_sources (static)

    x = x_ref[...]                                                    # (TB, D)

    # ---- all S source transforms: Linear -> ReLU -> Linear ----------------
    h = jnp.dot(x, w1_ref[...], preferred_element_type=jnp.float32) + b1_ref[...]
    h = jnp.maximum(h, 0.0)                                           # (TB, S*H)
    out = jnp.dot(h, w2_ref[...], preferred_element_type=jnp.float32) + b2_ref[...]
                                                                      # (TB, S*D)

    # ---- all S confidence nets: Linear -> ReLU -> Linear -> Sigmoid -------
    hc = jnp.dot(out, wc1_ref[...], preferred_element_type=jnp.float32) + bc1_ref[...]
    hc = jnp.maximum(hc, 0.0)                                         # (TB, S*C)
    logits = jnp.dot(hc, wc2_ref[...], preferred_element_type=jnp.float32) + bc2_ref[...]
    conf = jax.nn.sigmoid(logits)                                     # (TB, S)

    # ---- weighted fusion over sources --------------------------------------
    cw = lam_ref[...] * conf                                          # (TB, S)
    den = jnp.sum(cw, axis=-1, keepdims=True) + 1e-6                  # (TB, 1)

    acc = out[:, 0:D] * cw[:, 0:1]
    for s in range(1, S):            # S is a small static constant -> unrolled
        acc = acc + out[:, s * D:(s + 1) * D] * cw[:, s:s + 1]

    out_ref[...] = out.astype(out_ref.dtype)       # (TB, S*D) lane-dense
    conf_ref[...] = conf.astype(conf_ref.dtype)    # (TB, S)
    final_ref[...] = (acc / den).astype(final_ref.dtype)


# -----------------------------------------------------------------------------
# Parameter packing: stacked per-source params -> lane-packed / block-diagonal
# slabs consumed by the kernel.  Do this once, reuse across forward calls.
# -----------------------------------------------------------------------------
def pack_params(p):
    S, D, H = p["w1"].shape
    C = p["wc1"].shape[-1]
    eye = jnp.eye(S, dtype=p["w1"].dtype)

    w1p = jnp.transpose(p["w1"], (1, 0, 2)).reshape(D, S * H)          # (D, S*H)
    b1p = p["b1"].reshape(1, S * H)
    w2bd = jnp.einsum("shd,st->shtd", p["w2"], eye).reshape(S * H, S * D)
    b2p = p["b2"].reshape(1, S * D)
    wc1bd = jnp.einsum("sdc,st->sdtc", p["wc1"], eye).reshape(S * D, S * C)
    bc1p = p["bc1"].reshape(1, S * C)
    wc2bd = jnp.einsum("sc,st->sct", p["wc2"][:, :, 0], eye).reshape(S * C, S)
    bc2p = p["bc2"].reshape(1, S)
    lam = p["lam"].reshape(1, S)

    return dict(w1p=w1p, b1p=b1p, w2bd=w2bd, b2p=b2p,
                wc1bd=wc1bd, bc1p=bc1p, wc2bd=wc2bd, bc2p=bc2p,
                lam=lam, dims=(S, D, H, C))


# -----------------------------------------------------------------------------
# Forward pass.  Returns (output, dict) matching the PyTorch module.
# -----------------------------------------------------------------------------
def lagrangian_source_integration(x, packed, *, block_b=None):
    B, D = x.shape
    S, D_, H, C = packed["dims"]
    assert D == D_
    SH, SD, SC = S * H, S * D, S * C

    # Batch tile: full batch for small B, 128-row tiles (8-sublane aligned)
    # when B is large enough to split across v7x's TensorCores.
    if block_b is None:
        block_b = B if (B <= 128 or B % 128 != 0) else 128
    assert B % block_b == 0
    grid = (B // block_b,)

    full = lambda shape: pl.BlockSpec(shape, lambda i: (0,) * len(shape))
    tile = lambda last: pl.BlockSpec((block_b, last), lambda i: (i, 0))

    out_shapes = (
        jax.ShapeDtypeStruct((B, SD), jnp.float32),   # per-source outputs, lane-packed
        jax.ShapeDtypeStruct((B, S), jnp.float32),    # per-source confidences
        jax.ShapeDtypeStruct((B, D), jnp.float32),    # fused output
    )

    out_flat, conf_flat, final = pl.pallas_call(
        _lagrangian_kernel,
        out_shape=out_shapes,
        grid=grid,
        in_specs=[
            tile(D),            # x
            full((1, S)),       # lambda weights
            full((D, SH)),      # W1 packed
            full((1, SH)),      # b1 packed
            full((SH, SD)),     # W2 block-diagonal
            full((1, SD)),      # b2 packed
            full((SD, SC)),     # Wc1 block-diagonal
            full((1, SC)),      # bc1 packed
            full((SC, S)),      # Wc2 block-diagonal
            full((1, S)),       # bc2 packed
        ],
        out_specs=(tile(SD), tile(S), tile(D)),
        compiler_params=pltpu.CompilerParams(
            dimension_semantics=("parallel",)),
    )(x, packed["lam"],
      packed["w1p"], packed["b1p"], packed["w2bd"], packed["b2p"],
      packed["wc1bd"], packed["bc1p"], packed["wc2bd"], packed["bc2p"])

    outputs = out_flat.reshape(B, S, D)        # free (row-major) reshape
    confidences = conf_flat.reshape(B, S, 1)   # free reshape
    return final, {"weights": packed["lam"].reshape(-1),
                   "outputs": outputs,
                   "confidences": confidences}


# -----------------------------------------------------------------------------
# Deterministic parameter init (shapes from the module __init__).
# -----------------------------------------------------------------------------
def init_params(key, n_sources, input_dim, hidden_dim, conf_hidden=32):
    ks = jax.random.split(key, 8)
    S, D, H, C = n_sources, input_dim, hidden_dim, conf_hidden

    def u(k, shape, fan_in):
        bound = 1.0 / jnp.sqrt(fan_in)
        return jax.random.uniform(k, shape, jnp.float32, -bound, bound)

    return dict(
        w1=u(ks[0], (S, D, H), D),
        b1=u(ks[1], (S, 1, H), D),
        w2=u(ks[2], (S, H, D), H),
        b2=u(ks[3], (S, 1, D), H),
        wc1=u(ks[4], (S, D, C), D),
        bc1=u(ks[5], (S, 1, C), D),
        wc2=u(ks[6], (S, C, 1), C),
        bc2=u(ks[7], (S, 1, 1), C),
        lam=jnp.ones((S,), jnp.float32) / S,   # lambda_weights = ones(S)/S
        # mu, nu only appear in augmented_lagrangian_loss (not in forward)
    )


# -----------------------------------------------------------------------------
# Pure-JAX reference (uses the *unpacked* per-source params, so it also
# validates the packing).
# -----------------------------------------------------------------------------
def reference_forward(x, p):
    S = p["lam"].shape[0]
    outs, confs = [], []
    for i in range(S):
        h = jnp.maximum(x @ p["w1"][i] + p["b1"][i, 0], 0.0)
        o = h @ p["w2"][i] + p["b2"][i, 0]
        hc = jnp.maximum(o @ p["wc1"][i] + p["bc1"][i, 0], 0.0)
        c = jax.nn.sigmoid(hc @ p["wc2"][i] + p["bc2"][i, 0])
        outs.append(o)
        confs.append(c)
    outputs = jnp.stack(outs, axis=1)        # [B, S, D]
    confidences = jnp.stack(confs, axis=1)   # [B, S, 1]
    w = p["lam"].reshape(1, -1, 1)
    cw = w * confidences
    cw = cw / (cw.sum(axis=1, keepdims=True) + 1e-6)
    return (outputs * cw).sum(axis=1), outputs, confidences


if __name__ == "__main__":
    n_sources, batch, input_dim, hidden_dim = 4, 8, 32, 32

    key = jax.random.PRNGKey(0)
    kx, kp = jax.random.split(key)
    x = jax.random.normal(kx, (batch, input_dim), jnp.float32)
    params = init_params(kp, n_sources, input_dim, hidden_dim)
    packed = pack_params(params)

    out, aux = lagrangian_source_integration(x, packed)
    out = jax.block_until_ready(out)

    ref_out, ref_outputs, ref_confs = reference_forward(x, params)
    assert jnp.allclose(out, ref_out, atol=1e-5, rtol=1e-5), "final output mismatch"
    assert jnp.allclose(aux["outputs"], ref_outputs, atol=1e-5, rtol=1e-5), "outputs mismatch"
    assert jnp.allclose(aux["confidences"], ref_confs, atol=1e-5, rtol=1e-5), "confidences mismatch"

    print("KERNEL_OK")
</pallas_src>

<mosaic_0001>
module attributes {stable_mosaic.version = 11 : i64} {
  func.func @_lagrangian_kernel(%arg0: i32, %arg1: memref<8x32xf32, #tpu.memory_space<vmem>>, %arg2: memref<1x4xf32, #tpu.memory_space<vmem>>, %arg3: memref<32x128xf32, #tpu.memory_space<vmem>>, %arg4: memref<1x128xf32, #tpu.memory_space<vmem>>, %arg5: memref<128x128xf32, #tpu.memory_space<vmem>>, %arg6: memref<1x128xf32, #tpu.memory_space<vmem>>, %arg7: memref<128x128xf32, #tpu.memory_space<vmem>>, %arg8: memref<1x128xf32, #tpu.memory_space<vmem>>, %arg9: memref<128x4xf32, #tpu.memory_space<vmem>>, %arg10: memref<1x4xf32, #tpu.memory_space<vmem>>, %arg11: memref<8x128xf32, #tpu.memory_space<vmem>>, %arg12: memref<8x4xf32, #tpu.memory_space<vmem>>, %arg13: memref<8x32xf32, #tpu.memory_space<vmem>>) attributes {dimension_semantics = [#tpu.dimension_semantics<parallel>], iteration_bounds = array<i64: 1>, scalar_prefetch = 0 : i64, scratch_operands = 0 : i64, tpu.core_type = #tpu.core_type<tc>, window_params = [{transform_indices = @transform_0, window_bounds = array<i64: 8, 32>}, {pipeline_mode = #tpu.pipeline_mode<synchronous>, transform_indices = @transform_1, window_bounds = array<i64: 1, 4>}, {pipeline_mode = #tpu.pipeline_mode<synchronous>, transform_indices = @transform_2, window_bounds = array<i64: 32, 128>}, {pipeline_mode = #tpu.pipeline_mode<synchronous>, transform_indices = @transform_3, window_bounds = array<i64: 1, 128>}, {pipeline_mode = #tpu.pipeline_mode<synchronous>, transform_indices = @transform_4, window_bounds = array<i64: 128, 128>}, {pipeline_mode = #tpu.pipeline_mode<synchronous>, transform_indices = @transform_5, window_bounds = array<i64: 1, 128>}, {pipeline_mode = #tpu.pipeline_mode<synchronous>, transform_indices = @transform_6, window_bounds = array<i64: 128, 128>}, {pipeline_mode = #tpu.pipeline_mode<synchronous>, transform_indices = @transform_7, window_bounds = array<i64: 1, 128>}, {pipeline_mode = #tpu.pipeline_mode<synchronous>, transform_indices = @transform_8, window_bounds = array<i64: 128, 4>}, {pipeline_mode = #tpu.pipeline_mode<synchronous>, transform_indices = @transform_9, window_bounds = array<i64: 1, 4>}, {transform_indices = @transform_10, window_bounds = array<i64: 8, 128>}, {transform_indices = @transform_11, window_bounds = array<i64: 8, 4>}, {transform_indices = @transform_12, window_bounds = array<i64: 8, 32>}]} {
    %c0 = arith.constant 0 : index
    %c0_0 = arith.constant 0 : index
    %0 = vector.load %arg1[%c0, %c0_0] : memref<8x32xf32, #tpu.memory_space<vmem>>, vector<8x32xf32>
    %c0_1 = arith.constant 0 : index
    %c0_2 = arith.constant 0 : index
    %1 = vector.load %arg3[%c0_1, %c0_2] : memref<32x128xf32, #tpu.memory_space<vmem>>, vector<32x128xf32>
    %cst = arith.constant dense<0.000000e+00> : vector<8x128xf32>
    %2 = tpu.matmul %0, %1, %cst {dimension_numbers = #tpu.dot_dimension_numbers<[1], [0], [0], [1], [0, 0, 1, 1], [], []>} : vector<8x32xf32>, vector<32x128xf32>, vector<8x128xf32> -> vector<8x128xf32>
    %c0_3 = arith.constant 0 : index
    %c0_4 = arith.constant 0 : index
    %3 = vector.load %arg4[%c0_3, %c0_4] : memref<1x128xf32, #tpu.memory_space<vmem>>, vector<1x128xf32>
    %4 = vector.broadcast %3 : vector<1x128xf32> to vector<8x128xf32>
    %5 = arith.addf %2, %4 : vector<8x128xf32>
    %cst_5 = arith.constant 0.000000e+00 : f32
    %6 = vector.broadcast %cst_5 : f32 to vector<8x128xf32>
    %7 = arith.maximumf %5, %6 : vector<8x128xf32>
    %c0_6 = arith.constant 0 : index
    %c0_7 = arith.constant 0 : index
    %8 = vector.load %arg5[%c0_6, %c0_7] : memref<128x128xf32, #tpu.memory_space<vmem>>, vector<128x128xf32>
    %cst_8 = arith.constant dense<0.000000e+00> : vector<8x128xf32>
    %9 = tpu.matmul %7, %8, %cst_8 {dimension_numbers = #tpu.dot_dimension_numbers<[1], [0], [0], [1], [0, 0, 1, 1], [], []>} : vector<8x128xf32>, vector<128x128xf32>, vector<8x128xf32> -> vector<8x128xf32>
    %c0_9 = arith.constant 0 : index
    %c0_10 = arith.constant 0 : index
    %10 = vector.load %arg6[%c0_9, %c0_10] : memref<1x128xf32, #tpu.memory_space<vmem>>, vector<1x128xf32>
    %11 = vector.broadcast %10 : vector<1x128xf32> to vector<8x128xf32>
    %12 = arith.addf %9, %11 : vector<8x128xf32>
    %c0_11 = arith.constant 0 : index
    %c0_12 = arith.constant 0 : index
    %13 = vector.load %arg7[%c0_11, %c0_12] : memref<128x128xf32, #tpu.memory_space<vmem>>, vector<128x128xf32>
    %cst_13 = arith.constant dense<0.000000e+00> : vector<8x128xf32>
    %14 = tpu.matmul %12, %13, %cst_13 {dimension_numbers = #tpu.dot_dimension_numbers<[1], [0], [0], [1], [0, 0, 1, 1], [], []>} : vector<8x128xf32>, vector<128x128xf32>, vector<8x128xf32> -> vector<8x128xf32>
    %c0_14 = arith.constant 0 : index
    %c0_15 = arith.constant 0 : index
    %15 = vector.load %arg8[%c0_14, %c0_15] : memref<1x128xf32, #tpu.memory_space<vmem>>, vector<1x128xf32>
    %16 = vector.broadcast %15 : vector<1x128xf32> to vector<8x128xf32>
    %17 = arith.addf %14, %16 : vector<8x128xf32>
    %cst_16 = arith.constant 0.000000e+00 : f32
    %18 = vector.broadcast %cst_16 : f32 to vector<8x128xf32>
    %19 = arith.maximumf %17, %18 : vector<8x128xf32>
    %c0_17 = arith.constant 0 : index
    %c0_18 = arith.constant 0 : index
    %20 = vector.load %arg9[%c0_17, %c0_18] : memref<128x4xf32, #tpu.memory_space<vmem>>, vector<128x4xf32>
    %cst_19 = arith.constant dense<0.000000e+00> : vector<8x4xf32>
    %21 = tpu.matmul %19, %20, %cst_19 {dimension_numbers = #tpu.dot_dimension_numbers<[1], [0], [0], [1], [0, 0, 1, 1], [], []>} : vector<8x128xf32>, vector<128x4xf32>, vector<8x4xf32> -> vector<8x4xf32>
    %c0_20 = arith.constant 0 : index
    %c0_21 = arith.constant 0 : index
    %22 = vector.load %arg10[%c0_20, %c0_21] : memref<1x4xf32, #tpu.memory_space<vmem>>, vector<1x4xf32>
    %23 = vector.broadcast %22 : vector<1x4xf32> to vector<8x4xf32>
    %24 = arith.addf %21, %23 : vector<8x4xf32>
    %25 = arith.negf %24 : vector<8x4xf32>
    %26 = math.exp %25 : vector<8x4xf32>
    %cst_22 = arith.constant 1.000000e+00 : f32
    %27 = vector.broadcast %cst_22 : f32 to vector<8x4xf32>
    %28 = arith.addf %27, %26 : vector<8x4xf32>
    %29 = arith.divf %27, %28 : vector<8x4xf32>
    %c0_23 = arith.constant 0 : index
    %c0_24 = arith.constant 0 : index
    %30 = vector.load %arg2[%c0_23, %c0_24] : memref<1x4xf32, #tpu.memory_space<vmem>>, vector<1x4xf32>
    %31 = vector.broadcast %30 : vector<1x4xf32> to vector<8x4xf32>
    %32 = arith.mulf %31, %29 : vector<8x4xf32>
    %cst_25 = arith.constant dense<0.000000e+00> : vector<8xf32>
    %33 = vector.multi_reduction <add>, %32, %cst_25 [1] : vector<8x4xf32> to vector<8xf32>
    %34 = vector.shape_cast %33 : vector<8xf32> to vector<8x1xf32>
    %cst_26 = arith.constant 9.99999997E-7 : f32
    %35 = vector.broadcast %cst_26 : f32 to vector<8x1xf32>
    %36 = arith.addf %34, %35 : vector<8x1xf32>
    %37 = vector.extract_strided_slice %12 {offsets = [0, 0], sizes = [8, 32], strides = [1, 1]} : vector<8x128xf32> to vector<8x32xf32>
    %38 = vector.extract_strided_slice %32 {offsets = [0, 0], sizes = [8, 1], strides = [1, 1]} : vector<8x4xf32> to vector<8x1xf32>
    %39 = vector.broadcast %38 : vector<8x1xf32> to vector<8x32xf32>
    %40 = arith.mulf %37, %39 : vector<8x32xf32>
    %41 = vector.extract_strided_slice %12 {offsets = [0, 32], sizes = [8, 32], strides = [1, 1]} : vector<8x128xf32> to vector<8x32xf32>
    %42 = vector.extract_strided_slice %32 {offsets = [0, 1], sizes = [8, 1], strides = [1, 1]} : vector<8x4xf32> to vector<8x1xf32>
    %43 = vector.broadcast %42 : vector<8x1xf32> to vector<8x32xf32>
    %44 = arith.mulf %41, %43 : vector<8x32xf32>
    %45 = arith.addf %40, %44 : vector<8x32xf32>
    %46 = vector.extract_strided_slice %12 {offsets = [0, 64], sizes = [8, 32], strides = [1, 1]} : vector<8x128xf32> to vector<8x32xf32>
    %47 = vector.extract_strided_slice %32 {offsets = [0, 2], sizes = [8, 1], strides = [1, 1]} : vector<8x4xf32> to vector<8x1xf32>
    %48 = vector.broadcast %47 : vector<8x1xf32> to vector<8x32xf32>
    %49 = arith.mulf %46, %48 : vector<8x32xf32>
    %50 = arith.addf %45, %49 : vector<8x32xf32>
    %51 = vector.extract_strided_slice %12 {offsets = [0, 96], sizes = [8, 32], strides = [1, 1]} : vector<8x128xf32> to vector<8x32xf32>
    %52 = vector.extract_strided_slice %32 {offsets = [0, 3], sizes = [8, 1], strides = [1, 1]} : vector<8x4xf32> to vector<8x1xf32>
    %53 = vector.broadcast %52 : vector<8x1xf32> to vector<8x32xf32>
    %54 = arith.mulf %51, %53 : vector<8x32xf32>
    %55 = arith.addf %50, %54 : vector<8x32xf32>
    %c0_27 = arith.constant 0 : index
    %c0_28 = arith.constant 0 : index
    %56 = vector.load %arg11[%c0_27, %c0_28] : memref<8x128xf32, #tpu.memory_space<vmem>>, vector<8x128xf32>
    tpu.vector_store %arg11[%c0_27, %c0_28], %12 {strides = array<i32>} : memref<8x128xf32, #tpu.memory_space<vmem>>, vector<8x128xf32>,
    %c0_29 = arith.constant 0 : index
    %c0_30 = arith.constant 0 : index
    %57 = vector.load %arg12[%c0_29, %c0_30] : memref<8x4xf32, #tpu.memory_space<vmem>>, vector<8x4xf32>
    tpu.vector_store %arg12[%c0_29, %c0_30], %29 {strides = array<i32>} : memref<8x4xf32, #tpu.memory_space<vmem>>, vector<8x4xf32>,
    %58 = vector.broadcast %36 : vector<8x1xf32> to vector<8x32xf32>
    %59 = arith.divf %55, %58 : vector<8x32xf32>
    %c0_31 = arith.constant 0 : index
    %c0_32 = arith.constant 0 : index
    %60 = vector.load %arg13[%c0_31, %c0_32] : memref<8x32xf32, #tpu.memory_space<vmem>>, vector<8x32xf32>
    tpu.vector_store %arg13[%c0_31, %c0_32], %59 {strides = array<i32>} : memref<8x32xf32, #tpu.memory_space<vmem>>, vector<8x32xf32>,
    return
  }
  func.func @transform_0(%arg0: i32) -> (i32, i32) {
    %c0_i32 = arith.constant 0 : i32
    %c0_i32_0 = arith.constant 0 : i32
    return %arg0, %c0_i32 : i32, i32
  }
  func.func @transform_1(%arg0: i32) -> (i32, i32) {
    %c0_i32 = arith.constant 0 : i32
    %c0_i32_0 = arith.constant 0 : i32
    %c0_i32_1 = arith.constant 0 : i32
    return %c0_i32, %c0_i32_0 : i32, i32
  }
  func.func @transform_2(%arg0: i32) -> (i32, i32) {
    %c0_i32 = arith.constant 0 : i32
    %c0_i32_0 = arith.constant 0 : i32
    %c0_i32_1 = arith.constant 0 : i32
    return %c0_i32, %c0_i32_0 : i32, i32
  }
  func.func @transform_3(%arg0: i32) -> (i32, i32) {
    %c0_i32 = arith.constant 0 : i32
    %c0_i32_0 = arith.constant 0 : i32
    %c0_i32_1 = arith.constant 0 : i32
    return %c0_i32, %c0_i32_0 : i32, i32
  }
  func.func @transform_4(%arg0: i32) -> (i32, i32) {
    %c0_i32 = arith.constant 0 : i32
    %c0_i32_0 = arith.constant 0 : i32
    %c0_i32_1 = arith.constant 0 : i32
    return %c0_i32, %c0_i32_0 : i32, i32
  }
  func.func @transform_5(%arg0: i32) -> (i32, i32) {
    %c0_i32 = arith.constant 0 : i32
    %c0_i32_0 = arith.constant 0 : i32
    %c0_i32_1 = arith.constant 0 : i32
    return %c0_i32, %c0_i32_0 : i32, i32
  }
  func.func @transform_6(%arg0: i32) -> (i32, i32) {
    %c0_i32 = arith.constant 0 : i32
    %c0_i32_0 = arith.constant 0 : i32
    %c0_i32_1 = arith.constant 0 : i32
    return %c0_i32, %c0_i32_0 : i32, i32
  }
  func.func @transform_7(%arg0: i32) -> (i32, i32) {
    %c0_i32 = arith.constant 0 : i32
    %c0_i32_0 = arith.constant 0 : i32
    %c0_i32_1 = arith.constant 0 : i32
    return %c0_i32, %c0_i32_0 : i32, i32
  }
  func.func @transform_8(%arg0: i32) -> (i32, i32) {
    %c0_i32 = arith.constant 0 : i32
    %c0_i32_0 = arith.constant 0 : i32
    %c0_i32_1 = arith.constant 0 : i32
    return %c0_i32, %c0_i32_0 : i32, i32
  }
  func.func @transform_9(%arg0: i32) -> (i32, i32) {
    %c0_i32 = arith.constant 0 : i32
    %c0_i32_0 = arith.constant 0 : i32
    %c0_i32_1 = arith.constant 0 : i32
    return %c0_i32, %c0_i32_0 : i32, i32
  }
  func.func @transform_10(%arg0: i32) -> (i32, i32) {
    %c0_i32 = arith.constant 0 : i32
    %c0_i32_0 = arith.constant 0 : i32
    return %arg0, %c0_i32 : i32, i32
  }
  func.func @transform_11(%arg0: i32) -> (i32, i32) {
    %c0_i32 = arith.constant 0 : i32
    %c0_i32_0 = arith.constant 0 : i32
    return %arg0, %c0_i32 : i32, i32
  }
  func.func @transform_12(%arg0: i32) -> (i32, i32) {
    %c0_i32 = arith.constant 0 : i32
    %c0_i32_0 = arith.constant 0 : i32
    return %arg0, %c0_i32 : i32, i32
  }
}

</mosaic_0001>

<llo_original>
// kernel: tpu_custom_call.1
$region0: #{tpu_custom_call.1}
  #allocation0 [shape = 'u32[]', space=smem, size = 0x4, offset = 0x4, fixed_abs, tag = 'smem constant byte address 0x4 - core index']
  #allocation1 [shape = 'u32[144,128]{1,0:T(1,128)}', space=vmem, size = 0x12000, scoped, tag = 'internal scratch']
  %s0 = inlined_call_operand.vmem [shape: f32[8,32], index: 0, kind: input, shape index: {}]
  %s1 = inlined_call_operand.vmem [shape: f32[1,4], index: 1, kind: input, shape index: {}]
  %s2 = inlined_call_operand.hbm [shape: f32[32,128], index: 2, kind: input, shape index: {}]
  %s3 = inlined_call_operand.vmem [shape: f32[1,128], index: 3, kind: input, shape index: {}]
  %s4 = inlined_call_operand.vmem [shape: f32[128,128], index: 4, kind: input, shape index: {}]
  %s5 = inlined_call_operand.vmem [shape: f32[1,128], index: 5, kind: input, shape index: {}]
  %s6 = inlined_call_operand.hbm [shape: f32[128,128], index: 6, kind: input, shape index: {}]
  %s7 = inlined_call_operand.vmem [shape: f32[1,128], index: 7, kind: input, shape index: {}]
  %s8 = inlined_call_operand.vmem [shape: f32[128,4], index: 8, kind: input, shape index: {}]
  %s9 = inlined_call_operand.vmem [shape: f32[1,4], index: 9, kind: input, shape index: {}]
  %s10 = inlined_call_operand.hbm [shape: f32[8,128], index: 10, kind: output, shape index: {0}]
  %s11 = inlined_call_operand.vmem [shape: f32[8,4], index: 11, kind: output, shape index: {1}]
  %s12 = inlined_call_operand.hbm [shape: f32[8,32], index: 12, kind: output, shape index: {2}]
  %13 = xla_tuple %s10, %s11, %s12
  %s14 = sld [smem:[#allocation0]]
  $region74: #{tpu_custom_call.1} parent=0
    _
  %s16 = ssub.s32 1, %s14
  %s17 = scalar_select 0, %s16, %s14
  $region1: #{tpu_custom_call.1} parent=0
    #allocation2 [shape = 'u8[16384]{0}', space=vmem, size = 0x4000, scoped, tag = 'input window, operand 2, single buffered']
    #allocation3 [shape = 's32[1]{0}', space=sflag, size = 0x4, scoped, tag = 'scoped memory for tpu_custom_call.1']
    #allocation4 [shape = 's32[1]{0}', space=sflag, size = 0x4, scoped, tag = 'scoped memory for tpu_custom_call.1']
    #allocation5 [shape = 'u8[65536]{0}', space=vmem, size = 0x10000, scoped, tag = 'input window, operand 6, single buffered']
    #allocation6 [shape = 's32[1]{0}', space=sflag, size = 0x4, scoped, tag = 'scoped memory for tpu_custom_call.1']
    #allocation7 [shape = 'u8[4096]{0}', space=vmem, size = 0x1000, scoped, tag = 'output window, operand 0, single buffered']
    #allocation8 [shape = 'u8[4096]{0}', space=vmem, size = 0x1000, scoped, tag = 'output window, operand 2, single buffered']
    #allocation9 [shape = 's32[1]{0}', space=sflag, size = 0x4, scoped, tag = 'scoped memory for tpu_custom_call.1']
    %18 = vsyncpa [#allocation3], 0
    %19 = vsyncpa [#allocation6], 0
    %20 = vsyncpa [#allocation4], 0
    %21 = vsyncpa [#allocation9], 0
    // Predicated region
    $region2: #{tpu_custom_call.1} parent=1 // pred_check
      _
    $region3: #{tpu_custom_call.1} parent=1 // pred_check_branch
      %23 = sbr.rel (0) target = $region5
    $region4: #{tpu_custom_call.1} parent=1 // pred_region
      _
    $region5: #{tpu_custom_call.1} parent=1 // pred_fallthru
      _
    // Predicated region
    $region6: #{tpu_custom_call.1} parent=1 // pred_check
      _
    $region7: #{tpu_custom_call.1} parent=1 // pred_check_branch
      %25 = sbr.rel (0) target = $region9
    $region8: #{tpu_custom_call.1} parent=1 // pred_region
      _
    $region9: #{tpu_custom_call.1} parent=1 // pred_fallthru
      _
    // Predicated region
    $region10: #{tpu_custom_call.1} parent=1 // pred_check
      _
    $region11: #{tpu_custom_call.1} parent=1 // pred_check_branch
      %27 = sbr.rel (0) target = $region13
    $region12: #{tpu_custom_call.1} parent=1 // pred_region
      %s29 = ssub.s32 512, 512
      %30 = vsyncadd [#allocation3], %s29
      %s31 = sshll.u32 [#allocation2], 4
      %s32 = int_to_ptr.vmem [resolvable:$true] %s31
      %37 = dma.hbm_to_vmem [thread:$0]  %s2, 512, %s32, [#allocation3], 128, 128, 8
    $region13: #{tpu_custom_call.1} parent=1 // pred_fallthru
      _
    // Predicated region
    $region14: #{tpu_custom_call.1} parent=1 // pred_check
      _
    $region15: #{tpu_custom_call.1} parent=1 // pred_check_branch
      %39 = sbr.rel (0) target = $region17
    $region16: #{tpu_custom_call.1} parent=1 // pred_region
      _
    $region17: #{tpu_custom_call.1} parent=1 // pred_fallthru
      _
    // Predicated region
    $region18: #{tpu_custom_call.1} parent=1 // pred_check
      _
    $region19: #{tpu_custom_call.1} parent=1 // pred_check_branch
      %41 = sbr.rel (0) target = $region21
    $region20: #{tpu_custom_call.1} parent=1 // pred_region
      _
    $region21: #{tpu_custom_call.1} parent=1 // pred_fallthru
      _
    // Predicated region
    $region22: #{tpu_custom_call.1} parent=1 // pred_check
      _
    $region23: #{tpu_custom_call.1} parent=1 // pred_check_branch
      %43 = sbr.rel (0) target = $region25
    $region24: #{tpu_custom_call.1} parent=1 // pred_region
      _
    $region25: #{tpu_custom_call.1} parent=1 // pred_fallthru
      _
    // Predicated region
    $region26: #{tpu_custom_call.1} parent=1 // pred_check
      _
    $region27: #{tpu_custom_call.1} parent=1 // pred_check_branch
      %45 = sbr.rel (0) target = $region29
    $region28: #{tpu_custom_call.1} parent=1 // pred_region
      %s47 = ssub.s32 2048, 2048
      %48 = vsyncadd [#allocation6], %s47
      %s49 = sshll.u32 [#allocation5], 4
      %s50 = int_to_ptr.vmem [resolvable:$true] %s49
      %55 = dma.hbm_to_vmem [thread:$0]  %s6, 2048, %s50, [#allocation6], 128, 128, 8
    $region29: #{tpu_custom_call.1} parent=1 // pred_fallthru
      _
    // Predicated region
    $region30: #{tpu_custom_call.1} parent=1 // pred_check
      _
    $region31: #{tpu_custom_call.1} parent=1 // pred_check_branch
      %57 = sbr.rel (0) target = $region33
    $region32: #{tpu_custom_call.1} parent=1 // pred_region
      _
    $region33: #{tpu_custom_call.1} parent=1 // pred_fallthru
      _
    // Predicated region
    $region34: #{tpu_custom_call.1} parent=1 // pred_check
      _
    $region35: #{tpu_custom_call.1} parent=1 // pred_check_branch
      %59 = sbr.rel (0) target = $region37
    $region36: #{tpu_custom_call.1} parent=1 // pred_region
      _
    $region37: #{tpu_custom_call.1} parent=1 // pred_fallthru
      _
    // Predicated region
    $region38: #{tpu_custom_call.1} parent=1 // pred_check
      _
    $region39: #{tpu_custom_call.1} parent=1 // pred_check_branch
      %61 = sbr.rel (0) target = $region41
    $region40: #{tpu_custom_call.1} parent=1 // pred_region
      _
    $region41: #{tpu_custom_call.1} parent=1 // pred_fallthru
      _
    // Predicated region
    $region42: #{tpu_custom_call.1} parent=1 // pred_check
      _
    $region43: #{tpu_custom_call.1} parent=1 // pred_check_branch
      %63 = sbr.rel (0) target = $region45
    $region44: #{tpu_custom_call.1} parent=1 // pred_region
      %64 = dma.done [#allocation3], 512
    $region45: #{tpu_custom_call.1} parent=1 // pred_fallthru
      _
    // Predicated region
    $region46: #{tpu_custom_call.1} parent=1 // pred_check
      _
    $region47: #{tpu_custom_call.1} parent=1 // pred_check_branch
      %66 = sbr.rel (0) target = $region49
    $region48: #{tpu_custom_call.1} parent=1 // pred_region
      %67 = dma.done [#allocation6], 2048
    $region49: #{tpu_custom_call.1} parent=1 // pred_fallthru
      _
    %v68 = vld [vmem:[%s0] sm:$0xff]
    %v69 = vld [vmem:[#allocation2] sm:$0xff]
    %v70 = vld [vmem:[#allocation2 + $0x8] sm:$0xff]
    %v71 = vld [vmem:[#allocation2 + $0x10] sm:$0xff]
    %v72 = vld [vmem:[#allocation2 + $0x18] sm:$0xff]
    %v73 = vld [vmem:[%s3] sm:$0x1]
    %v75 = vlaneseq
    %v76 = vshrl.u32 %v75, 7
    %v77 = vsub.s32 0, %v76
    %v78 = vrot.slane %v73, %v77
    %vm80 = vcmask 261120
    %v82 = vsel %vm80, %v68, 0
    %84 = vmatprep.subr.mxu0 0.0
    %85 = vmatpush1.msra.mxu0 %v69
    %86 = vmatprep.subr.mxu0 0.0
    %87 = vmatpush1.msra.mxu0 %v70
    %88 = vmatprep.subr.mxu0 0.0
    %89 = vmatpush1.msra.mxu0 %v71
    %90 = vmatprep.subr.mxu0 0.0
    %91 = vmatpush1.msra.mxu0 %v72
    %92 = vmatprep.subr.mxu0 0.0
    %93 = vmatpush1.msra.mxu0 0.0
    %94 = vmatprep.subr.mxu0 0.0
    %95 = vmatpush1.msra.mxu0 0.0
    %96 = vmatprep.subr.mxu0 0.0
    %97 = vmatpush1.msra.mxu0 0.0
    %98 = vmatprep.subr.mxu0 0.0
    %99 = vmatpush1.msra.mxu0 0.0
    %100 = vmatprep.subr.mxu0 0.0
    %101 = vmatpush1.msra.mxu0 0.0
    %102 = vmatprep.subr.mxu0 0.0
    %103 = vmatpush1.msra.mxu0 0.0
    %104 = vmatprep.subr.mxu0 0.0
    %105 = vmatpush1.msra.mxu0 0.0
    %106 = vmatprep.subr.mxu0 0.0
    %107 = vmatpush1.msra.mxu0 0.0
    %108 = vmatprep.subr.mxu0 0.0
    %109 = vmatpush1.msra.mxu0 0.0
    %110 = vmatprep.subr.mxu0 0.0
    %111 = vmatpush1.msra.mxu0 0.0
    %112 = vmatprep.subr.mxu0 0.0
    %113 = vmatpush1.msra.mxu0 0.0
    %114 = vmatprep.subr.mxu0 0.0
    %115 = vmatpush1.msra.mxu0 0.0
    %116 = vmatprep.subr.mxu0 0.0
    %117 = vmatpush1.msra.mxu0 0.0
    %118 = vmatprep.subr.mxu0 0.0
    %119 = vmatpush1.msra.mxu0 0.0
    %120 = vmatprep.subr.mxu0 0.0
    %121 = vmatpush1.msra.mxu0 0.0
    %122 = vmatprep.subr.mxu0 0.0
    %123 = vmatpush1.msra.mxu0 0.0
    %124 = vmatprep.subr.mxu0 0.0
    %125 = vmatpush1.msra.mxu0 0.0
    %126 = vmatprep.subr.mxu0 0.0
    %127 = vmatpush1.msra.mxu0 0.0
    %128 = vmatprep.subr.mxu0 0.0
    %129 = vmatpush1.msra.mxu0 0.0
    %130 = vmatprep.subr.mxu0 0.0
    %131 = vmatpush1.msra.mxu0 0.0
    %132 = vmatprep.subr.mxu0 0.0
    %133 = vmatpush1.msra.mxu0 0.0
    %134 = vmatprep.subr.mxu0 0.0
    %135 = vmatpush1.msra.mxu0 0.0
    %136 = vmatprep.subr.mxu0 0.0
    %137 = vmatpush1.msra.mxu0 0.0
    %138 = vmatprep.subr.mxu0 0.0
    %139 = vmatpush1.msra.mxu0 0.0
    %140 = vmatprep.subr.mxu0 0.0
    %141 = vmatpush1.msra.mxu0 0.0
    %142 = vmatprep.subr.mxu0 0.0
    %143 = vmatpush1.msra.mxu0 0.0
    %144 = vmatprep.subr.mxu0 0.0
    %145 = vmatpush1.msra.mxu0 0.0
    %146 = vmatprep.subr.mxu0 0.0
    %147 = vmatpush1.msra.mxu0 0.0
    %148 = vmatprep.mubr.f32.mxu0 0.0
    %149 = vmatmul.mubr.f32.gmra.mrb[0].mxu0 %v82
    %v150 = vpop.f32.mrb[0].mxu0
    %v151 = vadd.f32 %v78, %v150
    %v152 = vpop.f32.mrb[0].mxu0
    %153 = vdwg.mxu0
    %v154 = vmax.f32 %v151, 0.0
    %v155 = vld [vmem:[%s4] sm:$0xff]
    %v156 = vld [vmem:[%s4 + $0x8] sm:$0xff]
    %v157 = vld [vmem:[%s4 + $0x10] sm:$0xff]
    %v158 = vld [vmem:[%s4 + $0x18] sm:$0xff]
    %v159 = vld [vmem:[%s4 + $0x20] sm:$0xff]
    %v160 = vld [vmem:[%s4 + $0x28] sm:$0xff]
    %v161 = vld [vmem:[%s4 + $0x30] sm:$0xff]
    %v162 = vld [vmem:[%s4 + $0x38] sm:$0xff]
    %v163 = vld [vmem:[%s4 + $0x40] sm:$0xff]
    %v164 = vld [vmem:[%s4 + $0x48] sm:$0xff]
    %v165 = vld [vmem:[%s4 + $0x50] sm:$0xff]
    %v166 = vld [vmem:[%s4 + $0x58] sm:$0xff]
    %v167 = vld [vmem:[%s4 + $0x60] sm:$0xff]
    %v168 = vld [vmem:[%s4 + $0x68] sm:$0xff]
    %v169 = vld [vmem:[%s4 + $0x70] sm:$0xff]
    %v170 = vld [vmem:[%s4 + $0x78] sm:$0xff]
    %v171 = vld [vmem:[%s5] sm:$0x1]
    %v173 = vlaneseq
    %v174 = vshrl.u32 %v173, 7
    %v175 = vsub.s32 0, %v174
    %v176 = vrot.slane %v171, %v175
    %178 = vmatprep.subr.mxu0 0.0
    %179 = vmatpush1.msra.mxu0 %v155
    %180 = vmatprep.subr.mxu0 0.0
    %181 = vmatpush1.msra.mxu0 %v156
    %182 = vmatprep.subr.mxu0 0.0
    %183 = vmatpush1.msra.mxu0 %v157
    %184 = vmatprep.subr.mxu0 0.0
    %185 = vmatpush1.msra.mxu0 %v158
    %186 = vmatprep.subr.mxu0 0.0
    %187 = vmatpush1.msra.mxu0 %v159
    %188 = vmatprep.subr.mxu0 0.0
    %189 = vmatpush1.msra.mxu0 %v160
    %190 = vmatprep.subr.mxu0 0.0
    %191 = vmatpush1.msra.mxu0 %v161
    %192 = vmatprep.subr.mxu0 0.0
    %193 = vmatpush1.msra.mxu0 %v162
    %194 = vmatprep.subr.mxu0 0.0
    %195 = vmatpush1.msra.mxu0 %v163
    %196 = vmatprep.subr.mxu0 0.0
    %197 = vmatpush1.msra.mxu0 %v164
    %198 = vmatprep.subr.mxu0 0.0
    %199 = vmatpush1.msra.mxu0 %v165
    %200 = vmatprep.subr.mxu0 0.0
    %201 = vmatpush1.msra.mxu0 %v166
    %202 = vmatprep.subr.mxu0 0.0
    %203 = vmatpush1.msra.mxu0 %v167
    %204 = vmatprep.subr.mxu0 0.0
    %205 = vmatpush1.msra.mxu0 %v168
    %206 = vmatprep.subr.mxu0 0.0
    %207 = vmatpush1.msra.mxu0 %v169
    %208 = vmatprep.subr.mxu0 0.0
    %209 = vmatpush1.msra.mxu0 %v170
    %210 = vmatprep.subr.mxu0 0.0
    %211 = vmatpush1.msra.mxu0 0.0
    %212 = vmatprep.subr.mxu0 0.0
    %213 = vmatpush1.msra.mxu0 0.0
    %214 = vmatprep.subr.mxu0 0.0
    %215 = vmatpush1.msra.mxu0 0.0
    %216 = vmatprep.subr.mxu0 0.0
    %217 = vmatpush1.msra.mxu0 0.0
    %218 = vmatprep.subr.mxu0 0.0
    %219 = vmatpush1.msra.mxu0 0.0
    %220 = vmatprep.subr.mxu0 0.0
    %221 = vmatpush1.msra.mxu0 0.0
    %222 = vmatprep.subr.mxu0 0.0
    %223 = vmatpush1.msra.mxu0 0.0
    %224 = vmatprep.subr.mxu0 0.0
    %225 = vmatpush1.msra.mxu0 0.0
    %226 = vmatprep.subr.mxu0 0.0
    %227 = vmatpush1.msra.mxu0 0.0
    %228 = vmatprep.subr.mxu0 0.0
    %229 = vmatpush1.msra.mxu0 0.0
    %230 = vmatprep.subr.mxu0 0.0
    %231 = vmatpush1.msra.mxu0 0.0
    %232 = vmatprep.subr.mxu0 0.0
    %233 = vmatpush1.msra.mxu0 0.0
    %234 = vmatprep.subr.mxu0 0.0
    %235 = vmatpush1.msra.mxu0 0.0
    %236 = vmatprep.subr.mxu0 0.0
    %237 = vmatpush1.msra.mxu0 0.0
    %238 = vmatprep.subr.mxu0 0.0
    %239 = vmatpush1.msra.mxu0 0.0
    %240 = vmatprep.subr.mxu0 0.0
    %241 = vmatpush1.msra.mxu0 0.0
    %242 = vmatprep.mubr.f32.mxu0 0.0
    %243 = vmatmul.mubr.f32.gmra.mrb[0].mxu0 %v154
    %v244 = vpop.f32.mrb[0].mxu0
    %v245 = vadd.f32 %v176, %v244
    %v246 = vpop.f32.mrb[0].mxu0
    %247 = vdwg.mxu0
    %v248 = vld [vmem:[#allocation5] sm:$0xff]
    %v249 = vld [vmem:[#allocation5 + $0x8] sm:$0xff]
    %v250 = vld [vmem:[#allocation5 + $0x10] sm:$0xff]
    %v251 = vld [vmem:[#allocation5 + $0x18] sm:$0xff]
    %v252 = vld [vmem:[#allocation5 + $0x20] sm:$0xff]
    %v253 = vld [vmem:[#allocation5 + $0x28] sm:$0xff]
    %v254 = vld [vmem:[#allocation5 + $0x30] sm:$0xff]
    %v255 = vld [vmem:[#allocation5 + $0x38] sm:$0xff]
    %v256 = vld [vmem:[#allocation5 + $0x40] sm:$0xff]
    %v257 = vld [vmem:[#allocation5 + $0x48] sm:$0xff]
    %v258 = vld [vmem:[#allocation5 + $0x50] sm:$0xff]
    %v259 = vld [vmem:[#allocation5 + $0x58] sm:$0xff]
    %v260 = vld [vmem:[#allocation5 + $0x60] sm:$0xff]
    %v261 = vld [vmem:[#allocation5 + $0x68] sm:$0xff]
    %v262 = vld [vmem:[#allocation5 + $0x70] sm:$0xff]
    %v263 = vld [vmem:[#allocation5 + $0x78] sm:$0xff]
    %v264 = vld [vmem:[%s7] sm:$0x1]
    %v266 = vlaneseq
    %v267 = vshrl.u32 %v266, 7
    %v268 = vsub.s32 0, %v267
    %v269 = vrot.slane %v264, %v268
    %271 = vmatprep.subr.mxu0 0.0
    %272 = vmatpush1.msra.mxu0 %v248
    %273 = vmatprep.subr.mxu0 0.0
    %274 = vmatpush1.msra.mxu0 %v249
    %275 = vmatprep.subr.mxu0 0.0
    %276 = vmatpush1.msra.mxu0 %v250
    %277 = vmatprep.subr.mxu0 0.0
    %278 = vmatpush1.msra.mxu0 %v251
    %279 = vmatprep.subr.mxu0 0.0
    %280 = vmatpush1.msra.mxu0 %v252
    %281 = vmatprep.subr.mxu0 0.0
    %282 = vmatpush1.msra.mxu0 %v253
    %283 = vmatprep.subr.mxu0 0.0
    %284 = vmatpush1.msra.mxu0 %v254
    %285 = vmatprep.subr.mxu0 0.0
    %286 = vmatpush1.msra.mxu0 %v255
    %287 = vmatprep.subr.mxu0 0.0
    %288 = vmatpush1.msra.mxu0 %v256
    %289 = vmatprep.subr.mxu0 0.0
    %290 = vmatpush1.msra.mxu0 %v257
    %291 = vmatprep.subr.mxu0 0.0
    %292 = vmatpush1.msra.mxu0 %v258
    %293 = vmatprep.subr.mxu0 0.0
    %294 = vmatpush1.msra.mxu0 %v259
    %295 = vmatprep.subr.mxu0 0.0
    %296 = vmatpush1.msra.mxu0 %v260
    %297 = vmatprep.subr.mxu0 0.0
    %298 = vmatpush1.msra.mxu0 %v261
    %299 = vmatprep.subr.mxu0 0.0
    %300 = vmatpush1.msra.mxu0 %v262
    %301 = vmatprep.subr.mxu0 0.0
    %302 = vmatpush1.msra.mxu0 %v263
    %303 = vmatprep.subr.mxu0 0.0
    %304 = vmatpush1.msra.mxu0 0.0
    %305 = vmatprep.subr.mxu0 0.0
    %306 = vmatpush1.msra.mxu0 0.0
    %307 = vmatprep.subr.mxu0 0.0
    %308 = vmatpush1.msra.mxu0 0.0
    %309 = vmatprep.subr.mxu0 0.0
    %310 = vmatpush1.msra.mxu0 0.0
    %311 = vmatprep.subr.mxu0 0.0
    %312 = vmatpush1.msra.mxu0 0.0
    %313 = vmatprep.subr.mxu0 0.0
    %314 = vmatpush1.msra.mxu0 0.0
    %315 = vmatprep.subr.mxu0 0.0
    %316 = vmatpush1.msra.mxu0 0.0
    %317 = vmatprep.subr.mxu0 0.0
    %318 = vmatpush1.msra.mxu0 0.0
    %319 = vmatprep.subr.mxu0 0.0
    %320 = vmatpush1.msra.mxu0 0.0
    %321 = vmatprep.subr.mxu0 0.0
    %322 = vmatpush1.msra.mxu0 0.0
    %323 = vmatprep.subr.mxu0 0.0
    %324 = vmatpush1.msra.mxu0 0.0
    %325 = vmatprep.subr.mxu0 0.0
    %326 = vmatpush1.msra.mxu0 0.0
    %327 = vmatprep.subr.mxu0 0.0
    %328 = vmatpush1.msra.mxu0 0.0
    %329 = vmatprep.subr.mxu0 0.0
    %330 = vmatpush1.msra.mxu0 0.0
    %331 = vmatprep.subr.mxu0 0.0
    %332 = vmatpush1.msra.mxu0 0.0
    %333 = vmatprep.subr.mxu0 0.0
    %334 = vmatpush1.msra.mxu0 0.0
    %335 = vmatprep.mubr.f32.mxu0 0.0
    %336 = vmatmul.mubr.f32.gmra.mrb[0].mxu0 %v245
    %v337 = vpop.f32.mrb[0].mxu0
    %v338 = vadd.f32 %v269, %v337
    %v339 = vpop.f32.mrb[0].mxu0
    %340 = vdwg.mxu0
    %v341 = vmax.f32 %v338, 0.0
    %v342 = vld [vmem:[%s8] sm:$0xff]
    %v343 = vld [vmem:[%s8 + $0x8] sm:$0xff]
    %v344 = vld [vmem:[%s8 + $0x10] sm:$0xff]
    %v345 = vld [vmem:[%s8 + $0x18] sm:$0xff]
    %v346 = vld [vmem:[%s8 + $0x20] sm:$0xff]
    %v347 = vld [vmem:[%s8 + $0x28] sm:$0xff]
    %v348 = vld [vmem:[%s8 + $0x30] sm:$0xff]
    %v349 = vld [vmem:[%s8 + $0x38] sm:$0xff]
    %v350 = vld [vmem:[%s8 + $0x40] sm:$0xff]
    %v351 = vld [vmem:[%s8 + $0x48] sm:$0xff]
    %v352 = vld [vmem:[%s8 + $0x50] sm:$0xff]
    %v353 = vld [vmem:[%s8 + $0x58] sm:$0xff]
    %v354 = vld [vmem:[%s8 + $0x60] sm:$0xff]
    %v355 = vld [vmem:[%s8 + $0x68] sm:$0xff]
    %v356 = vld [vmem:[%s8 + $0x70] sm:$0xff]
    %v357 = vld [vmem:[%s8 + $0x78] sm:$0xff]
    %v358 = vld [vmem:[%s9] sm:$0x1]
    %v360 = vlaneseq
    %v361 = vshrl.u32 %v360, 7
    %v362 = vsub.s32 0, %v361
    %v363 = vrot.slane %v358, %v362
    %365 = vmatprep.subr.mxu0 0.0
    %366 = vmatpush1.msra.mxu0 %v342
    %367 = vmatprep.subr.mxu0 0.0
    %368 = vmatpush1.msra.mxu0 %v343
    %369 = vmatprep.subr.mxu0 0.0
    %370 = vmatpush1.msra.mxu0 %v344
    %371 = vmatprep.subr.mxu0 0.0
    %372 = vmatpush1.msra.mxu0 %v345
    %373 = vmatprep.subr.mxu0 0.0
    %374 = vmatpush1.msra.mxu0 %v346
    %375 = vmatprep.subr.mxu0 0.0
    %376 = vmatpush1.msra.mxu0 %v347
    %377 = vmatprep.subr.mxu0 0.0
    %378 = vmatpush1.msra.mxu0 %v348
    %379 = vmatprep.subr.mxu0 0.0
    %380 = vmatpush1.msra.mxu0 %v349
    %381 = vmatprep.subr.mxu0 0.0
    %382 = vmatpush1.msra.mxu0 %v350
    %383 = vmatprep.subr.mxu0 0.0
    %384 = vmatpush1.msra.mxu0 %v351
    %385 = vmatprep.subr.mxu0 0.0
    %386 = vmatpush1.msra.mxu0 %v352
    %387 = vmatprep.subr.mxu0 0.0
    %388 = vmatpush1.msra.mxu0 %v353
    %389 = vmatprep.subr.mxu0 0.0
    %390 = vmatpush1.msra.mxu0 %v354
    %391 = vmatprep.subr.mxu0 0.0
    %392 = vmatpush1.msra.mxu0 %v355
    %393 = vmatprep.subr.mxu0 0.0
    %394 = vmatpush1.msra.mxu0 %v356
    %395 = vmatprep.subr.mxu0 0.0
    %396 = vmatpush1.msra.mxu0 %v357
    %397 = vmatprep.subr.mxu0 0.0
    %398 = vmatpush1.msra.mxu0 0.0
    %399 = vmatprep.subr.mxu0 0.0
    %400 = vmatpush1.msra.mxu0 0.0
    %401 = vmatprep.subr.mxu0 0.0
    %402 = vmatpush1.msra.mxu0 0.0
    %403 = vmatprep.subr.mxu0 0.0
    %404 = vmatpush1.msra.mxu0 0.0
    %405 = vmatprep.subr.mxu0 0.0
    %406 = vmatpush1.msra.mxu0 0.0
    %407 = vmatprep.subr.mxu0 0.0
    %408 = vmatpush1.msra.mxu0 0.0
    %409 = vmatprep.subr.mxu0 0.0
    %410 = vmatpush1.msra.mxu0 0.0
    %411 = vmatprep.subr.mxu0 0.0
    %412 = vmatpush1.msra.mxu0 0.0
    %413 = vmatprep.subr.mxu0 0.0
    %414 = vmatpush1.msra.mxu0 0.0
    %415 = vmatprep.subr.mxu0 0.0
    %416 = vmatpush1.msra.mxu0 0.0
    %417 = vmatprep.subr.mxu0 0.0
    %418 = vmatpush1.msra.mxu0 0.0
    %419 = vmatprep.subr.mxu0 0.0
    %420 = vmatpush1.msra.mxu0 0.0
    %421 = vmatprep.subr.mxu0 0.0
    %422 = vmatpush1.msra.mxu0 0.0
    %423 = vmatprep.subr.mxu0 0.0
    %424 = vmatpush1.msra.mxu0 0.0
    %425 = vmatprep.subr.mxu0 0.0
    %426 = vmatpush1.msra.mxu0 0.0
    %427 = vmatprep.subr.mxu0 0.0
    %428 = vmatpush1.msra.mxu0 0.0
    %429 = vmatprep.mubr.f32.mxu0 0.0
    %430 = vmatmul.mubr.f32.gmra.mrb[0].mxu0 %v341
    %v431 = vpop.f32.mrb[0].mxu0
    %v432 = vadd.f32 %v363, %v431
    %v433 = vpop.f32.mrb[0].mxu0
    %434 = vdwg.mxu0
    %v435 = vxor.u32 %v432, 2147483648
    %v436 = vmul.f32 %v435, 1.442695
    %v437 = vpow.pop %v436
    %v438 = vadd.f32 %v437, 1.0
    %v439 = vrcp.pop %v438
    %v440 = vmul.f32 1.0, %v439
    %v441 = vld [vmem:[%s1] sm:$0x1]
    %v443 = vlaneseq
    %v444 = vshrl.u32 %v443, 7
    %v445 = vsub.s32 0, %v444
    %v446 = vrot.slane %v441, %v445
    %v448 = vmul.f32 %v446, %v440
    %vm449 = vcmask 31744
    %v450 = vsel %vm449, %v448, 0.0
    %451 = vadd.xlane.f32.xlu0 %v450
    %v452 = vpop.xlane.xlu0 %451
    %v453 = vadd.f32 %v452, 1e-06
    %455 = vset.pattern.permute.xlu0 0
    %456 = vperm.xlu0 %455, %v448
    %v457 = vpop.permute.xlu0 %456
    %v459 = vmul.f32 %v245, %v457
    %460 = vset.pattern.permute.xlu0 1
    %461 = vperm.xlu0 %460, %v448
    %v462 = vpop.permute.xlu0 %461
    %v464 = vmul.f32 %v245, %v462
    %466 = vrot.lane.b32.xlu0 %v464, 96
    %v467 = vpop.permute.xlu0 %466
    %v469 = vadd.f32 %v459, %v467
    %470 = vset.pattern.permute.xlu0 2
    %471 = vperm.xlu0 %470, %v448
    %v472 = vpop.permute.xlu0 %471
    %v474 = vmul.f32 %v245, %v472
    %476 = vrot.lane.b32.xlu0 %v474, 64
    %v477 = vpop.permute.xlu0 %476
    %v479 = vadd.f32 %v469, %v477
    %480 = vset.pattern.permute.xlu0 3
    %481 = vperm.xlu0 %480, %v448
    %v482 = vpop.permute.xlu0 %481
    %v484 = vmul.f32 %v245, %v482
    %486 = vrot.lane.b32.xlu0 %v484, 32
    %v487 = vpop.permute.xlu0 %486
    %v489 = vadd.f32 %v479, %v487
    %490 = vst [vmem:[#allocation7] sm:$0xff] %v245
    %491 = vst.msk [vmem:[%s11] sm:$0xff] %vm449, %v440
    %v492 = vrcp.pop %v453
    %v493 = vmul.f32 %v489, %v492
    %494 = vst.msk [vmem:[#allocation8] sm:$0xff] %vm80, %v493
    // Predicated region
    $region50: #{tpu_custom_call.1} parent=1 // pred_check
      _
    $region51: #{tpu_custom_call.1} parent=1 // pred_check_branch
      %496 = sbr.rel (0) target = $region53
    $region52: #{tpu_custom_call.1} parent=1 // pred_region
      %s498 = ssub.s32 128, 128
      %499 = vsyncadd [#allocation4], %s498
      %s501 = sshll.u32 [#allocation7], 4
      %s502 = int_to_ptr.vmem [resolvable:$true] %s501
      %504 = dma.vmem_to_hbm [thread:$0]  %s502, 128, %s10, [#allocation4]
    $region53: #{tpu_custom_call.1} parent=1 // pred_fallthru
      _
    // Predicated region
    $region54: #{tpu_custom_call.1} parent=1 // pred_check
      _
    $region55: #{tpu_custom_call.1} parent=1 // pred_check_branch
      %506 = sbr.rel (0) target = $region57
    $region56: #{tpu_custom_call.1} parent=1 // pred_region
      _
    $region57: #{tpu_custom_call.1} parent=1 // pred_fallthru
      _
    // Predicated region
    $region58: #{tpu_custom_call.1} parent=1 // pred_check
      _
    $region59: #{tpu_custom_call.1} parent=1 // pred_check_branch
      %508 = sbr.rel (0) target = $region61
    $region60: #{tpu_custom_call.1} parent=1 // pred_region
      %s510 = ssub.s32 128, 128
      %511 = vsyncadd [#allocation9], %s510
      %s513 = sshll.u32 [#allocation8], 4
      %s514 = int_to_ptr.vmem [resolvable:$true] %s513
      %516 = dma.vmem_to_hbm [thread:$0]  %s514, 128, %s12, [#allocation9]
    $region61: #{tpu_custom_call.1} parent=1 // pred_fallthru
      _
    // Predicated region
    $region62: #{tpu_custom_call.1} parent=1 // pred_check
      _
    $region63: #{tpu_custom_call.1} parent=1 // pred_check_branch
      %518 = sbr.rel (0) target = $region65
    $region64: #{tpu_custom_call.1} parent=1 // pred_region
      %519 = dma.done [#allocation4], 128
    $region65: #{tpu_custom_call.1} parent=1 // pred_fallthru
      _
    // Predicated region
    $region66: #{tpu_custom_call.1} parent=1 // pred_check
      _
    $region67: #{tpu_custom_call.1} parent=1 // pred_check_branch
      %521 = sbr.rel (0) target = $region69
    $region68: #{tpu_custom_call.1} parent=1 // pred_region
      _
    $region69: #{tpu_custom_call.1} parent=1 // pred_fallthru
      _
    // Predicated region
    $region70: #{tpu_custom_call.1} parent=1 // pred_check
      _
    $region71: #{tpu_custom_call.1} parent=1 // pred_check_branch
      %523 = sbr.rel (0) target = $region73
    $region72: #{tpu_custom_call.1} parent=1 // pred_region
      %524 = dma.done [#allocation9], 128
    $region73: #{tpu_custom_call.1} parent=1 // pred_fallthru
      _
    %525 = vsyncpa [#allocation3], 1
    %526 = vsyncpa [#allocation6], 1
    %527 = vsyncpa [#allocation4], 1
    %528 = vsyncpa [#allocation9], 1

</llo_original>
